<compile_context>
chip_gen: v6e
topology: v6e:2x2x1
jax: 0.10.0
libtpu: 0.0.40
codegen_flags: <defaults>
</compile_context>

<pallas_src>
import jax
import jax.numpy as jnp
from jax import lax
from jax.experimental import pallas as pl
from jax.experimental.pallas import tpu as pltpu


def _linear_softmax_kernel(x_ref, w_ref, b_ref, score_ref, prob_ref):
    """One grid step = one batch element.

    x_ref:     (F, T)   feature-major activation slab for this batch
    w_ref:     (F, C)   fc weight (pre-transposed, whole-resident in VMEM)
    b_ref:     (1, C)   fc bias
    score_ref: (T, C)
    prob_ref:  (T, C)   softmax over the time axis (axis 0)
    """
    # Transposed-LHS matmul: contract feature axis of x (dim 0) against feature
    # axis of w (dim 0) -> (T, C). This fuses torch's permute(0,3,1,2) into the
    # MXU op — no separate XLA transpose of the activation in HBM.
    s = lax.dot_general(
        x_ref[...], w_ref[...],
        dimension_numbers=(((0,), (0,)), ((), ())),
        preferred_element_type=jnp.float32,
    ) + b_ref[...]
    score_ref[...] = s.astype(score_ref.dtype)

    # Softmax over time (axis 0) — single batched reduce, no concatenate.
    m = jnp.max(s, axis=0, keepdims=True)            # (1, C)
    e = jnp.exp(s - m)                                # (T, C)
    denom = jnp.sum(e, axis=0, keepdims=True)         # (1, C)
    # Exact divide (one reciprocal per class column) to hold the 1e-5 tolerance;
    # do NOT use pl.reciprocal(approx=True) here.
    prob_ref[...] = (e * (1.0 / denom)).astype(prob_ref.dtype)


def prepare_params(weight_fc, bias_fc):
    """Done ONCE at model init — hoisted out of the per-call forward path.

    weight_fc: (C, F) torch nn.Linear.weight layout.  Returns ((F, C), (1, C)).
    """
    C, F = weight_fc.shape
    w_fc = jnp.asarray(weight_fc, dtype=jnp.float32).T          # (F, C)
    b_1c = jnp.asarray(bias_fc, dtype=jnp.float32).reshape(1, C)
    return w_fc, b_1c


def linear_model_forward(x_bhwt, w_fc, b_1c, outtime):
    """x_bhwt: (B, H, W, T) float32.  w_fc: (F, C), b_1c: (1, C) from prepare_params."""
    B, H, W, T = x_bhwt.shape
    assert T == outtime
    F = H * W
    Fw, C = w_fc.shape
    assert Fw == F

    # Free metadata reshape: (H, W) are contiguous, T stays last -> (B, F, T).
    x_bft = x_bhwt.reshape(B, F, T)

    flops = 2 * B * T * F * C + 4 * B * T * C             # matmul + softmax arith
    bytes_accessed = 4 * (B * F * T + F * C + C + 2 * B * T * C)
    cost = pl.CostEstimate(flops=flops,
                           transcendentals=B * T * C,      # exp
                           bytes_accessed=bytes_accessed)

    score, probs = pl.pallas_call(
        _linear_softmax_kernel,
        out_shape=(
            jax.ShapeDtypeStruct((B, T, C), jnp.float32),
            jax.ShapeDtypeStruct((B, T, C), jnp.float32),
        ),
        grid_spec=pltpu.PrefetchScalarGridSpec(
            num_scalar_prefetch=0,
            grid=(B,),
            in_specs=[
                # Per-batch activation slab; leading batch dim squeezed away.
                pl.BlockSpec((None, F, T), lambda b: (b, 0, 0)),
                # Weight / bias: constant block index -> VMEM-resident, no re-DMA.
                pl.BlockSpec((F, C), lambda b: (0, 0)),
                pl.BlockSpec((1, C), lambda b: (0, 0)),
            ],
            out_specs=[
                pl.BlockSpec((None, T, C), lambda b: (b, 0, 0)),
                pl.BlockSpec((None, T, C), lambda b: (b, 0, 0)),
            ],
        ),
        compiler_params=pltpu.CompilerParams(
            dimension_semantics=("parallel",),   # lets v7x shard batch over 2 TCs
        ),
        cost_estimate=cost,
    )(x_bft, w_fc, b_1c)

    net = {"score": score}
    return score, probs, net


if __name__ == "__main__":
    # Small shapes consistent with the module:
    #   input_shape = (H, W) = (4, 8)  -> F = 32
    #   outtime (T) = 16, nclasses (C) = 8, batch = 2
    B, H, W, T, C = 2, 4, 8, 16, 8
    F = H * W

    key = jax.random.PRNGKey(0)
    kx, kw, kb = jax.random.split(key, 3)

    x = jax.random.normal(kx, (B, H, W, T), dtype=jnp.float32)

    # Deterministic param init mimicking nn.Linear default (uniform +-1/sqrt(F))
    bound = 1.0 / jnp.sqrt(jnp.float32(F))
    weight_fc = jax.random.uniform(kw, (C, F), minval=-bound, maxval=bound,
                                   dtype=jnp.float32)
    bias_fc = jax.random.uniform(kb, (C,), minval=-bound, maxval=bound,
                                 dtype=jnp.float32)

    # "Init-time" parameter prep (hoisted out of the forward hot path).
    w_fc, b_1c = prepare_params(weight_fc, bias_fc)

    score, probs, net = linear_model_forward(x, w_fc, b_1c, outtime=T)
    jax.block_until_ready((score, probs))

    # Pure-JAX reference check (torch-equivalent forward)
    x_btf = jnp.transpose(x, (0, 3, 1, 2)).reshape(B, T, F)
    score_ref = x_btf @ weight_fc.T + bias_fc
    probs_ref = jax.nn.softmax(score_ref, axis=1)
    assert score.shape == (B, T, C) and probs.shape == (B, T, C)
    assert jnp.allclose(score, score_ref, atol=1e-5, rtol=1e-5)
    assert jnp.allclose(probs, probs_ref, atol=1e-5, rtol=1e-5)
    assert net["score"].shape == (B, T, C)

    print("KERNEL_OK")
</pallas_src>

<mosaic_0001>
module attributes {stable_mosaic.version = 11 : i64} {
  func.func @_linear_softmax_kernel(%arg0: i32, %arg1: memref<1x32x16xf32, #tpu.memory_space<vmem>>, %arg2: memref<32x8xf32, #tpu.memory_space<vmem>>, %arg3: memref<1x8xf32, #tpu.memory_space<vmem>>, %arg4: memref<1x16x8xf32, #tpu.memory_space<vmem>>, %arg5: memref<1x16x8xf32, #tpu.memory_space<vmem>>) attributes {dimension_semantics = [#tpu.dimension_semantics<parallel>], iteration_bounds = array<i64: 2>, scalar_prefetch = 0 : i64, scratch_operands = 0 : i64, tpu.core_type = #tpu.core_type<tc>, window_params = [{transform_indices = @transform_0, window_bounds = array<i64: 1, 32, 16>}, {pipeline_mode = #tpu.pipeline_mode<synchronous>, transform_indices = @transform_1, window_bounds = array<i64: 32, 8>}, {pipeline_mode = #tpu.pipeline_mode<synchronous>, transform_indices = @transform_2, window_bounds = array<i64: 1, 8>}, {transform_indices = @transform_3, window_bounds = array<i64: 1, 16, 8>}, {transform_indices = @transform_4, window_bounds = array<i64: 1, 16, 8>}]} {
    %c0 = arith.constant 0 : index
    %c0_0 = arith.constant 0 : index
    %c0_1 = arith.constant 0 : index
    %0 = vector.load %arg1[%c0, %c0_0, %c0_1] : memref<1x32x16xf32, #tpu.memory_space<vmem>>, vector<1x32x16xf32>
    %1 = vector.shape_cast %0 : vector<1x32x16xf32> to vector<32x16xf32>
    %c0_2 = arith.constant 0 : index
    %c0_3 = arith.constant 0 : index
    %2 = vector.load %arg2[%c0_2, %c0_3] : memref<32x8xf32, #tpu.memory_space<vmem>>, vector<32x8xf32>
    %cst = arith.constant dense<0.000000e+00> : vector<16x8xf32>
    %3 = tpu.matmul %1, %2, %cst {dimension_numbers = #tpu.dot_dimension_numbers<[0], [0], [1], [1], [0, 1, 1, 1], [], []>} : vector<32x16xf32>, vector<32x8xf32>, vector<16x8xf32> -> vector<16x8xf32>
    %c0_4 = arith.constant 0 : index
    %c0_5 = arith.constant 0 : index
    %4 = vector.load %arg3[%c0_4, %c0_5] : memref<1x8xf32, #tpu.memory_space<vmem>>, vector<1x8xf32>
    %5 = vector.broadcast %4 : vector<1x8xf32> to vector<16x8xf32>
    %6 = arith.addf %3, %5 : vector<16x8xf32>
    %c0_6 = arith.constant 0 : index
    %c0_7 = arith.constant 0 : index
    %c0_8 = arith.constant 0 : index
    %7 = vector.load %arg4[%c0_6, %c0_7, %c0_8] : memref<1x16x8xf32, #tpu.memory_space<vmem>>, vector<1x16x8xf32>
    %8 = vector.shape_cast %7 : vector<1x16x8xf32> to vector<16x8xf32>
    %9 = vector.shape_cast %6 : vector<16x8xf32> to vector<1x16x8xf32>
    tpu.vector_store %arg4[%c0_6, %c0_7, %c0_8], %9 {strides = array<i32>} : memref<1x16x8xf32, #tpu.memory_space<vmem>>, vector<1x16x8xf32>,
    %cst_9 = arith.constant dense<0xFF800000> : vector<8xf32>
    %10 = vector.multi_reduction <maximumf>, %6, %cst_9 [0] : vector<16x8xf32> to vector<8xf32>
    %11 = vector.shape_cast %10 : vector<8xf32> to vector<1x8xf32>
    %12 = vector.broadcast %11 : vector<1x8xf32> to vector<16x8xf32>
    %13 = arith.subf %6, %12 : vector<16x8xf32>
    %14 = math.exp %13 : vector<16x8xf32>
    %cst_10 = arith.constant dense<0.000000e+00> : vector<8xf32>
    %15 = vector.multi_reduction <add>, %14, %cst_10 [0] : vector<16x8xf32> to vector<8xf32>
    %16 = vector.shape_cast %15 : vector<8xf32> to vector<1x8xf32>
    %cst_11 = arith.constant 1.000000e+00 : f32
    %17 = vector.broadcast %cst_11 : f32 to vector<1x8xf32>
    %18 = arith.divf %17, %16 : vector<1x8xf32>
    %19 = vector.broadcast %18 : vector<1x8xf32> to vector<16x8xf32>
    %20 = arith.mulf %14, %19 : vector<16x8xf32>
    %c0_12 = arith.constant 0 : index
    %c0_13 = arith.constant 0 : index
    %c0_14 = arith.constant 0 : index
    %21 = vector.load %arg5[%c0_12, %c0_13, %c0_14] : memref<1x16x8xf32, #tpu.memory_space<vmem>>, vector<1x16x8xf32>
    %22 = vector.shape_cast %21 : vector<1x16x8xf32> to vector<16x8xf32>
    %23 = vector.shape_cast %20 : vector<16x8xf32> to vector<1x16x8xf32>
    tpu.vector_store %arg5[%c0_12, %c0_13, %c0_14], %23 {strides = array<i32>} : memref<1x16x8xf32, #tpu.memory_space<vmem>>, vector<1x16x8xf32>,
    return
  }
  func.func @transform_0(%arg0: i32) -> (i32, i32, i32) {
    %c0_i32 = arith.constant 0 : i32
    %c0_i32_0 = arith.constant 0 : i32
    %c0_i32_1 = arith.constant 0 : i32
    return %arg0, %c0_i32, %c0_i32_0 : i32, i32, i32
  }
  func.func @transform_1(%arg0: i32) -> (i32, i32) {
    %c0_i32 = arith.constant 0 : i32
    %c0_i32_0 = arith.constant 0 : i32
    %c0_i32_1 = arith.constant 0 : i32
    return %c0_i32, %c0_i32_0 : i32, i32
  }
  func.func @transform_2(%arg0: i32) -> (i32, i32) {
    %c0_i32 = arith.constant 0 : i32
    %c0_i32_0 = arith.constant 0 : i32
    %c0_i32_1 = arith.constant 0 : i32
    return %c0_i32, %c0_i32_0 : i32, i32
  }
  func.func @transform_3(%arg0: i32) -> (i32, i32, i32) {
    %c0_i32 = arith.constant 0 : i32
    %c0_i32_0 = arith.constant 0 : i32
    %c0_i32_1 = arith.constant 0 : i32
    return %arg0, %c0_i32, %c0_i32_0 : i32, i32, i32
  }
  func.func @transform_4(%arg0: i32) -> (i32, i32, i32) {
    %c0_i32 = arith.constant 0 : i32
    %c0_i32_0 = arith.constant 0 : i32
    %c0_i32_1 = arith.constant 0 : i32
    return %arg0, %c0_i32, %c0_i32_0 : i32, i32, i32
  }
}

</mosaic_0001>

<llo_original>
// kernel: tpu_custom_call.1
$region0: #{tpu_custom_call.1}
  #allocation0 [shape = 'u32[]', space=smem, size = 0x4, offset = 0x4, fixed_abs, tag = 'smem constant byte address 0x4 - core index']
  #allocation1 [shape = 'u32[144,128]{1,0:T(1,128)}', space=vmem, size = 0x12000, scoped, tag = 'internal scratch']
  %s0 = inlined_call_operand.vmem [shape: f32[2,32,16], index: 0, kind: input, shape index: {}]
  %s1 = inlined_call_operand.vmem [shape: f32[32,8], index: 1, kind: input, shape index: {}]
  %s2 = inlined_call_operand.vmem [shape: f32[1,8], index: 2, kind: input, shape index: {}]
  %s3 = inlined_call_operand.vmem [shape: f32[2,16,8], index: 3, kind: output, shape index: {0}]
  %s4 = inlined_call_operand.vmem [shape: f32[2,16,8], index: 4, kind: output, shape index: {1}]
  %5 = xla_tuple %s3, %s4
  %s6 = sld [smem:[#allocation0]]
  $region53: #{tpu_custom_call.1} parent=0
    _
  %s8 = ssub.s32 1, %s6
  %s9 = scalar_select 0, %s8, %s6
  loop: start=0, step=1, limit=4
  $region2: #{tpu_custom_call.1} parent=0 // loop_pre_header
    _
  $region3: #{tpu_custom_call.1} parent=0 // loop_header
    %s11 = sphi 0, %s15
    %p12 = scmp.ge.s32.totalorder %s11, 4
    %s21 = sphi 0, %s23
    %s24 = sphi 0, %s21
    %s25 = sphi 0, %s24
    %s41 = sphi 0, %s25
    %s45 = sphi 0, %s45
    %s47 = sphi 0, %s45
    %s48 = sphi 0, %s47
    %s62 = sphi 0, %s48
    %s66 = sphi 0, %s66
    %s68 = sphi 0, %s66
    %s69 = sphi 0, %s68
    %s83 = sphi 0, %s69
    %s89 = sphi 0, %s91
    %s92 = sphi 0, %s89
    %s93 = sphi 0, %s92
    %s109 = sphi 0, %s93
    %s115 = sphi 0, %s117
    %s118 = sphi 0, %s115
    %s119 = sphi 0, %s118
    %s135 = sphi 0, %s119
  $region4: #{tpu_custom_call.1} parent=0 // loop_header_branch
    %14 = sbr.rel (%p12) target = $region8
  $region5: #{tpu_custom_call.1} parent=0 // loop_body
    %s16 = ssub.s32 %s11, 1
    %s17 = ssub.s32 %s11, 2
    %s18 = sadd.s32 %s11, 1
    %s19 = ssub.s32 %s11, %s18
    %p20 = scmp.eq.s32.totalorder %s19, 0
    %s22 = sadd.s32 %s21, 1
    %s23 = scalar_select %p20, %s21, %s22
    %p26 = pneg %p20
    %p27 = scmp.eq.s32.totalorder %s11, 1
    %p28 = por %p26, %p27
    %p29 = scmp.ne.s32.totalorder %s21, %s24
    %p30 = scmp.eq.s32.totalorder %s11, 0
    %p31 = por %p29, %p30
    %p32 = scmp.ne.s32.totalorder %s21, %s24
    %p33 = scmp.eq.s32.totalorder %s16, 1
    %p34 = por %p32, %p33
    %p35 = scmp.ne.s32.totalorder %s24, %s25
    %p36 = scmp.eq.s32.totalorder %s16, 0
    %p37 = por %p35, %p36
    %p38 = scmp.ne.s32.totalorder %s24, %s25
    %p39 = scmp.eq.s32.totalorder %s17, 1
    %p40 = por %p38, %p39
    %p42 = scmp.ne.s32.totalorder %s25, %s41
    %p43 = scmp.eq.s32.totalorder %s17, 0
    %p44 = por %p42, %p43
    %s46 = sadd.s32 %s45, 1
    %p49 = scmp.eq.s32.totalorder %s11, 1
    %p50 = scmp.ne.s32.totalorder %s45, %s47
    %p51 = scmp.eq.s32.totalorder %s11, 0
    %p52 = por %p50, %p51
    %p53 = scmp.ne.s32.totalorder %s45, %s47
    %p54 = scmp.eq.s32.totalorder %s16, 1
    %p55 = por %p53, %p54
    %p56 = scmp.ne.s32.totalorder %s47, %s48
    %p57 = scmp.eq.s32.totalorder %s16, 0
    %p58 = por %p56, %p57
    %p59 = scmp.ne.s32.totalorder %s47, %s48
    %p60 = scmp.eq.s32.totalorder %s17, 1
    %p61 = por %p59, %p60
    %p63 = scmp.ne.s32.totalorder %s48, %s62
    %p64 = scmp.eq.s32.totalorder %s17, 0
    %p65 = por %p63, %p64
    %s67 = sadd.s32 %s66, 1
    %p70 = scmp.eq.s32.totalorder %s11, 1
    %p71 = scmp.ne.s32.totalorder %s66, %s68
    %p72 = scmp.eq.s32.totalorder %s11, 0
    %p73 = por %p71, %p72
    %p74 = scmp.ne.s32.totalorder %s66, %s68
    %p75 = scmp.eq.s32.totalorder %s16, 1
    %p76 = por %p74, %p75
    %p77 = scmp.ne.s32.totalorder %s68, %s69
    %p78 = scmp.eq.s32.totalorder %s16, 0
    %p79 = por %p77, %p78
    %p80 = scmp.ne.s32.totalorder %s68, %s69
    %p81 = scmp.eq.s32.totalorder %s17, 1
    %p82 = por %p80, %p81
    %p84 = scmp.ne.s32.totalorder %s69, %s83
    %p85 = scmp.eq.s32.totalorder %s17, 0
    %p86 = por %p84, %p85
    %s87 = ssub.s32 %s11, %s18
    %p88 = scmp.eq.s32.totalorder %s87, 0
    %s90 = sadd.s32 %s89, 1
    %s91 = scalar_select %p88, %s89, %s90
    %p94 = pneg %p88
    %p95 = scmp.eq.s32.totalorder %s11, 1
    %p96 = por %p94, %p95
    %p97 = scmp.ne.s32.totalorder %s89, %s92
    %p98 = scmp.eq.s32.totalorder %s11, 0
    %p99 = por %p97, %p98
    %p100 = scmp.ne.s32.totalorder %s89, %s92
    %p101 = scmp.eq.s32.totalorder %s16, 1
    %p102 = por %p100, %p101
    %p103 = scmp.ne.s32.totalorder %s92, %s93
    %p104 = scmp.eq.s32.totalorder %s16, 0
    %p105 = por %p103, %p104
    %p106 = scmp.ne.s32.totalorder %s92, %s93
    %p107 = scmp.eq.s32.totalorder %s17, 1
    %p108 = por %p106, %p107
    %p110 = scmp.ne.s32.totalorder %s93, %s109
    %p111 = scmp.eq.s32.totalorder %s17, 0
    %p112 = por %p110, %p111
    %s113 = ssub.s32 %s11, %s18
    %p114 = scmp.eq.s32.totalorder %s113, 0
    %s116 = sadd.s32 %s115, 1
    %s117 = scalar_select %p114, %s115, %s116
    %p120 = pneg %p114
    %p121 = scmp.eq.s32.totalorder %s11, 1
    %p122 = por %p120, %p121
    %p123 = scmp.ne.s32.totalorder %s115, %s118
    %p124 = scmp.eq.s32.totalorder %s11, 0
    %p125 = por %p123, %p124
    %p126 = scmp.ne.s32.totalorder %s115, %s118
    %p127 = scmp.eq.s32.totalorder %s16, 1
    %p128 = por %p126, %p127
    %p129 = scmp.ne.s32.totalorder %s118, %s119
    %p130 = scmp.eq.s32.totalorder %s16, 0
    %p131 = por %p129, %p130
    %p132 = scmp.ne.s32.totalorder %s118, %s119
    %p133 = scmp.eq.s32.totalorder %s17, 1
    %p134 = por %p132, %p133
    %p136 = scmp.ne.s32.totalorder %s119, %s135
    %p137 = scmp.eq.s32.totalorder %s17, 0
    %p138 = por %p136, %p137
    %p139 = scmp.le.s32.totalorder 1, %s11
    %p140 = scmp.lt.s32.totalorder %s11, 3
    %p141 = pnand %p139, %p140
    %p142 = pneg %p141
    // Predicated region
    $region9: #{tpu_custom_call.1} parent=5 // pred_check
      _
    $region10: #{tpu_custom_call.1} parent=5 // pred_check_branch
      %144 = sbr.rel (%p141) target = $region12
    $region11: #{tpu_custom_call.1} parent=5 // pred_region
      %s145 = ssub.s32 %s11, 1
      // Predicated region
      $region13: #{tpu_custom_call.1} parent=11 // pred_check
        %p146 = pneg %p58
      $region14: #{tpu_custom_call.1} parent=11 // pred_check_branch
        %148 = sbr.rel (%p146) target = $region16
      $region15: #{tpu_custom_call.1} parent=11 // pred_region
        _
      $region16: #{tpu_custom_call.1} parent=11 // pred_fallthru
        _
      // Predicated region
      $region17: #{tpu_custom_call.1} parent=11 // pred_check
        %p149 = pneg %p79
      $region18: #{tpu_custom_call.1} parent=11 // pred_check_branch
        %151 = sbr.rel (%p149) target = $region20
      $region19: #{tpu_custom_call.1} parent=11 // pred_region
        _
      $region20: #{tpu_custom_call.1} parent=11 // pred_fallthru
        _
    $region12: #{tpu_custom_call.1} parent=5 // pred_fallthru
      _
    %p152 = scmp.lt.s32.totalorder %s11, 2
    // Predicated region
    $region21: #{tpu_custom_call.1} parent=5 // pred_check
      %p153 = pneg %p152
    $region22: #{tpu_custom_call.1} parent=5 // pred_check_branch
      %155 = sbr.rel (%p153) target = $region24
    $region23: #{tpu_custom_call.1} parent=5 // pred_region
      // Predicated region
      $region25: #{tpu_custom_call.1} parent=23 // pred_check
        %p156 = pneg %p31
      $region26: #{tpu_custom_call.1} parent=23 // pred_check_branch
        %158 = sbr.rel (%p156) target = $region28
      $region27: #{tpu_custom_call.1} parent=23 // pred_region
        %p159 = scmp.lt.s32.totalorder %s11, 1
        %s160 = scalar_select %p159, %s11, 1
        %s161 = smul.addr %s160, 4
        %s162 = smul.addr %s161, 8
        %s163 = scalar_lea.vmem %s0, %s162
      $region28: #{tpu_custom_call.1} parent=23 // pred_fallthru
        _
    $region24: #{tpu_custom_call.1} parent=5 // pred_fallthru
      _
    %p164 = scmp.le.s32.totalorder 1, %s11
    %p165 = scmp.lt.s32.totalorder %s11, 3
    %p166 = pnand %p164, %p165
    %p167 = pneg %p166
    // Predicated region
    $region29: #{tpu_custom_call.1} parent=5 // pred_check
      _
    $region30: #{tpu_custom_call.1} parent=5 // pred_check_branch
      %169 = sbr.rel (%p166) target = $region32
    $region31: #{tpu_custom_call.1} parent=5 // pred_region
      %s170 = ssub.s32 %s11, 1
      %p171 = scmp.lt.s32.totalorder %s16, 1
      %s172 = scalar_select %p171, %s16, 1
      %s173 = smul.addr %s172, 4
      %s174 = smul.addr %s173, 8
      %s175 = scalar_lea.vmem %s0, %s174
      %p176 = pneg %p37
      %p177 = pneg %p34
      %p178 = pneg %p58
      %p179 = pneg %p55
      %p180 = pneg %p79
      %p181 = pneg %p76
      %p182 = pneg %p105
      %p183 = pneg %p102
      %p184 = scmp.lt.s32.totalorder %s16, 1
      %s185 = scalar_select %p184, %s16, 1
      %s186 = smul.addr %s185, 2
      %s187 = smul.addr %s186, 8
      %s188 = scalar_lea.vmem %s3, %s187
      %p189 = pneg %p131
      %p190 = pneg %p128
      %p191 = scmp.lt.s32.totalorder %s16, 1
      %s192 = scalar_select %p191, %s16, 1
      %s193 = smul.addr %s192, 2
      %s194 = smul.addr %s193, 8
      %s195 = scalar_lea.vmem %s4, %s194
      %p196 = scmp.lt.s32.totalorder %s16, 1
      %s197 = scalar_select %p196, %s16, 1
      %s198 = smul.addr %s197, 4
      %s199 = smul.addr %s198, 8
      %s200 = scalar_lea.vmem %s0, %s199
      %p201 = scmp.lt.s32.totalorder %s16, 1
      %s202 = scalar_select %p201, %s16, 1
      %s203 = smul.addr %s202, 2
      %s204 = smul.addr %s203, 8
      %s205 = scalar_lea.vmem %s3, %s204
      %p206 = scmp.lt.s32.totalorder %s16, 1
      %s207 = scalar_select %p206, %s16, 1
      %s208 = smul.addr %s207, 2
      %s209 = smul.addr %s208, 8
      %s210 = scalar_lea.vmem %s4, %s209
      %v211 = vld [vmem:[%s200] sm:$0xff]
      %v212 = vld [vmem:[%s200 + $0x8] sm:$0xff]
      %v213 = vld [vmem:[%s200 + $0x10] sm:$0xff]
      %v214 = vld [vmem:[%s200 + $0x18] sm:$0xff]
      %v215 = vld [vmem:[%s1] sm:$0xff]
      %v216 = vld [vmem:[%s1 + $0x8] sm:$0xff]
      %v217 = vld [vmem:[%s1 + $0x10] sm:$0xff]
      %v218 = vld [vmem:[%s1 + $0x18] sm:$0xff]
      %v219 = vld [vmem:[%s2] sm:$0x1]
      %v221 = vlaneseq
      %v222 = vshrl.u32 %v221, 7
      %v223 = vsub.s32 0, %v222
      %v224 = vrot.slane %v219, %v223
      %226 = vxpose.xlu0.b32.start [1/16] %v211, 128
      %227 = vxpose.xlu0.b32.cont [2/16] %v212, 128
      %228 = vxpose.xlu0.b32.cont [3/16] %v213, 128
      %229 = vxpose.xlu0.b32.cont [4/16] %v214, 128
      %230 = vxpose.xlu0.b32.cont [5/16] 0.0, 128
      %231 = vxpose.xlu0.b32.cont [6/16] 0.0, 128
      %232 = vxpose.xlu0.b32.cont [7/16] 0.0, 128
      %233 = vxpose.xlu0.b32.cont [8/16] 0.0, 128
      %234 = vxpose.xlu0.b32.cont [9/16] 0.0, 128
      %235 = vxpose.xlu0.b32.cont [10/16] 0.0, 128
      %236 = vxpose.xlu0.b32.cont [11/16] 0.0, 128
      %237 = vxpose.xlu0.b32.cont [12/16] 0.0, 128
      %238 = vxpose.xlu0.b32.cont [13/16] 0.0, 128
      %239 = vxpose.xlu0.b32.cont [14/16] 0.0, 128
      %240 = vxpose.xlu0.b32.cont [15/16] 0.0, 128
      %241 = vxpose.xlu0.b32.end [16/16] 0.0, 128
      %v242 = vpop.trf.xlu0
      %v243 = vpop.trf.xlu0
      %v244 = vpop.trf.xlu0
      %v245 = vpop.trf.xlu0
      %v246 = vpop.trf.xlu0
      %v247 = vpop.trf.xlu0
      %v248 = vpop.trf.xlu0
      %v249 = vpop.trf.xlu0
      %v250 = vpop.trf.xlu0
      %v251 = vpop.trf.xlu0
      %v252 = vpop.trf.xlu0
      %v253 = vpop.trf.xlu0
      %v254 = vpop.trf.xlu0
      %v255 = vpop.trf.xlu0
      %v256 = vpop.trf.xlu0
      %v257 = vpop.trf.xlu0
      %vm258 = vcmask 261120
      %v260 = vsel %vm258, %v242, 0
      %v263 = vsel %vm258, %v243, 0
      %265 = vmatprep.subr.mxu0 0.0
      %266 = vmatpush1.msra.mxu0 0.0
      %267 = vmatprep.subr.mxu0 0.0
      %268 = vmatpush1.msra.mxu0 0.0
      %269 = vmatprep.subr.mxu0 0.0
      %270 = vmatpush1.msra.mxu0 0.0
      %271 = vmatprep.subr.mxu0 0.0
      %272 = vmatpush1.msra.mxu0 0.0
      %273 = vmatprep.subr.mxu0 0.0
      %274 = vmatpush1.msra.mxu0 0.0
      %275 = vmatprep.subr.mxu0 0.0
      %276 = vmatpush1.msra.mxu0 0.0
      %277 = vmatprep.subr.mxu0 0.0
      %278 = vmatpush1.msra.mxu0 0.0
      %279 = vmatprep.subr.mxu0 0.0
      %280 = vmatpush1.msra.mxu0 0.0
      %281 = vmatprep.subr.mxu0 0.0
      %282 = vmatpush1.msra.mxu0 0.0
      %283 = vmatprep.subr.mxu0 0.0
      %284 = vmatpush1.msra.mxu0 0.0
      %285 = vmatprep.subr.mxu0 0.0
      %286 = vmatpush1.msra.mxu0 0.0
      %287 = vmatprep.subr.mxu0 0.0
      %288 = vmatpush1.msra.mxu0 0.0
      %289 = vmatprep.subr.mxu0 0.0
      %290 = vmatpush1.msra.mxu0 %v218
      %291 = vmatprep.subr.mxu0 0.0
      %292 = vmatpush1.msra.mxu0 %v217
      %293 = vmatprep.subr.mxu0 0.0
      %294 = vmatpush1.msra.mxu0 %v216
      %295 = vmatprep.subr.mxu0 0.0
      %296 = vmatpush1.msra.mxu0 %v215
      %297 = vmatprep.subr.mxu0 0.0
      %298 = vmatpush2.msra.mxu0 0.0
      %299 = vmatprep.subr.mxu0 0.0
      %300 = vmatpush2.msra.mxu0 0.0
      %301 = vmatprep.subr.mxu0 0.0
      %302 = vmatpush2.msra.mxu0 0.0
      %303 = vmatprep.subr.mxu0 0.0
      %304 = vmatpush2.msra.mxu0 0.0
      %305 = vmatprep.subr.mxu0 0.0
      %306 = vmatpush2.msra.mxu0 0.0
      %307 = vmatprep.subr.mxu0 0.0
      %308 = vmatpush2.msra.mxu0 0.0
      %309 = vmatprep.subr.mxu0 0.0
      %310 = vmatpush2.msra.mxu0 0.0
      %311 = vmatprep.subr.mxu0 0.0
      %312 = vmatpush2.msra.mxu0 0.0
      %313 = vmatprep.subr.mxu0 0.0
      %314 = vmatpush2.msra.mxu0 0.0
      %315 = vmatprep.subr.mxu0 0.0
      %316 = vmatpush2.msra.mxu0 0.0
      %317 = vmatprep.subr.mxu0 0.0
      %318 = vmatpush2.msra.mxu0 0.0
      %319 = vmatprep.subr.mxu0 0.0
      %320 = vmatpush2.msra.mxu0 0.0
      %321 = vmatprep.subr.mxu0 0.0
      %322 = vmatpush2.msra.mxu0 0.0
      %323 = vmatprep.subr.mxu0 0.0
      %324 = vmatpush2.msra.mxu0 0.0
      %325 = vmatprep.subr.mxu0 0.0
      %326 = vmatpush2.msra.mxu0 0.0
      %327 = vmatprep.subr.mxu0 0.0
      %328 = vmatpush2.msra.mxu0 0.0
      %329 = vmatprep.mubr.f32.mxu0 0.0
      %330 = vmatmul.mubr.f32.gmra.mxu0 %v260
      %v331 = vpop.f32.mrf.mxu0
      %v332 = vadd.f32 %v224, %v331
      %v333 = vpop.f32.mrf.mxu0
      %334 = vmatprep.mubr.f32.mxu0 0.0
      %335 = vmatmul.mubr.f32.gmra.mxu0 %v263
      %v336 = vpop.f32.mrf.mxu0
      %v337 = vadd.f32 %v224, %v336
      %v338 = vpop.f32.mrf.mxu0
      %339 = vdwg.mxu0
      %vm340 = vcmask 64512
      %341 = vst.msk [vmem:[%s205] sm:$0xff] %vm340, %v332
      %342 = vst.msk [vmem:[%s205 + $0x8] sm:$0xff] %vm340, %v337
      %v343 = vsel %vm340, %v332, -inf
      %v344 = vsel %vm340, %v337, -inf
      %v345 = vmax.f32 %v343, %v344
      %v346 = vrot.slane %v345, 4
      %v347 = vmax.f32 %v345, %v346
      %v348 = vrot.slane %v347, 2
      %v349 = vmax.f32 %v347, %v348
      %v350 = vrot.slane %v349, 1
      %v351 = vmax.f32 %v349, %v350
      %v352 = vsub.f32 %v332, %v351
      %v353 = vsub.f32 %v337, %v351
      %v354 = vmul.f32 %v352, 1.442695
      %v355 = vpow.pop %v354
      %v356 = vmul.f32 %v353, 1.442695
      %v357 = vpow.pop %v356
      %v358 = vsel %vm340, %v355, 0.0
      %v359 = vsel %vm340, %v357, 0.0
      %v360 = vadd.f32 %v358, %v359
      %v361 = vrot.slane %v360, 4
      %v362 = vadd.f32 %v360, %v361
      %v363 = vrot.slane %v362, 2
      %v364 = vadd.f32 %v362, %v363
      %v365 = vrot.slane %v364, 1
      %v366 = vadd.f32 %v364, %v365
      %v367 = vrcp.pop %v366
      %v368 = vmul.f32 1.0, %v367
      %v369 = vmul.f32 %v355, %v368
      %v370 = vmul.f32 %v357, %v368
      %371 = vst.msk [vmem:[%s210] sm:$0xff] %vm340, %v369
      %372 = vst.msk [vmem:[%s210 + $0x8] sm:$0xff] %vm340, %v370
      %p373 = scmp.lt.s32.totalorder %s16, 1
      %s374 = scalar_select %p373, %s16, 1
      %s375 = smul.addr %s374, 2
      %s376 = smul.addr %s375, 8
      %s377 = scalar_lea.vmem %s3, %s376
      %p378 = scmp.lt.s32.totalorder %s16, 1
      %s379 = scalar_select %p378, %s16, 1
      %s380 = smul.addr %s379, 2
      %s381 = smul.addr %s380, 8
      %s382 = scalar_lea.vmem %s4, %s381
      // Predicated region
      $region33: #{tpu_custom_call.1} parent=31 // pred_check
        %p383 = pneg %p102
      $region34: #{tpu_custom_call.1} parent=31 // pred_check_branch
        %385 = sbr.rel (%p383) target = $region36
      $region35: #{tpu_custom_call.1} parent=31 // pred_region
        _
      $region36: #{tpu_custom_call.1} parent=31 // pred_fallthru
        _
      // Predicated region
      $region37: #{tpu_custom_call.1} parent=31 // pred_check
        %p386 = pneg %p128
      $region38: #{tpu_custom_call.1} parent=31 // pred_check_branch
        %388 = sbr.rel (%p386) target = $region40
      $region39: #{tpu_custom_call.1} parent=31 // pred_region
        _
      $region40: #{tpu_custom_call.1} parent=31 // pred_fallthru
        _
    $region32: #{tpu_custom_call.1} parent=5 // pred_fallthru
      _
    %p389 = scmp.le.s32.totalorder 2, %s11
    // Predicated region
    $region41: #{tpu_custom_call.1} parent=5 // pred_check
      %p390 = pneg %p389
    $region42: #{tpu_custom_call.1} parent=5 // pred_check_branch
      %392 = sbr.rel (%p390) target = $region44
    $region43: #{tpu_custom_call.1} parent=5 // pred_region
      %s393 = ssub.s32 %s11, 2
      // Predicated region
      $region45: #{tpu_custom_call.1} parent=43 // pred_check
        %p394 = pneg %p108
      $region46: #{tpu_custom_call.1} parent=43 // pred_check_branch
        %396 = sbr.rel (%p394) target = $region48
      $region47: #{tpu_custom_call.1} parent=43 // pred_region
        %p397 = scmp.lt.s32.totalorder %s17, 1
        %s398 = scalar_select %p397, %s17, 1
        %s399 = smul.addr %s398, 2
        %s400 = smul.addr %s399, 8
        %s401 = scalar_lea.vmem %s3, %s400
      $region48: #{tpu_custom_call.1} parent=43 // pred_fallthru
        _
      // Predicated region
      $region49: #{tpu_custom_call.1} parent=43 // pred_check
        %p402 = pneg %p134
      $region50: #{tpu_custom_call.1} parent=43 // pred_check_branch
        %404 = sbr.rel (%p402) target = $region52
      $region51: #{tpu_custom_call.1} parent=43 // pred_region
        %p405 = scmp.lt.s32.totalorder %s17, 1
        %s406 = scalar_select %p405, %s17, 1
        %s407 = smul.addr %s406, 2
        %s408 = smul.addr %s407, 8
        %s409 = scalar_lea.vmem %s4, %s408
      $region52: #{tpu_custom_call.1} parent=43 // pred_fallthru
        _
    $region44: #{tpu_custom_call.1} parent=5 // pred_fallthru
      _
  $region6: #{tpu_custom_call.1} parent=0 // loop_footer
    %s15 = sadd.s32 1, %s11
  $region7: #{tpu_custom_call.1} parent=0 // loop_footer_branch
    %10 = sbr.rel target = $region3
  $region8: #{tpu_custom_call.1} parent=0 // loop_exit
    _

</llo_original>
